<compile_context>
chip_gen: v7x
topology: tpu7x:2x2x1
jax: 0.10.0
libtpu: 0.0.40
codegen_flags: <defaults>
</compile_context>

<pallas_src>
import jax
import jax.numpy as jnp
from jax import lax
from jax.experimental import pallas as pl
from jax.experimental.pallas import tpu as pltpu  # noqa: F401  (kept for TPU backend)

# Problem sizes (small, deterministic)
N, H, W = 2, 16, 16
C_IN, C_OUT = 4, 8
K, STRIDE, PAD = 3, 1, 1
EPS = 1e-5
KK = K * K
NHW = N * H * W
HW = H * W


def conv_bn_relu_kernel(w_ref, p_ref, gamma_ref, beta_ref, o_ref):
    """Fused conv (as one matmul) + training-mode BatchNorm + ReLU.

    w_ref:     (C_OUT, C_IN*K*K) = (8, 36)   weight matrix (rows: c_out, cols: c_in*9+kh*3+kw)
    p_ref:     (C_IN*K*K, N*H*W) = (36, 512) im2col patch matrix (lane-dense)
    gamma_ref: (C_OUT, 1)                     BN scale
    beta_ref:  (C_OUT, 1)                     BN shift
    o_ref:     (N, C_OUT, H*W) = (2, 8, 256)  lane-dense output (reshaped to NCHW outside)
    """
    # ---- Convolution: a single lane-dense MXU contraction --------------------
    # (8, 36) x (36, 512) -> (8, 512): both images in one push, 4-vreg result.
    y = jnp.dot(w_ref[...], p_ref[...], preferred_element_type=jnp.float32)

    # ---- BatchNorm statistics (biased batch variance), computed once ---------
    cnt = jnp.float32(NHW)
    mean = jnp.sum(y, axis=1, keepdims=True) / cnt        # (C_OUT, 1)
    d = y - mean
    var = jnp.sum(d * d, axis=1, keepdims=True) / cnt     # centered -> no cancellation
    inv = lax.rsqrt(var + EPS)                            # EUP slot
    scale = gamma_ref[...] * inv                          # (C_OUT, 1)
    shift = beta_ref[...] - mean * scale                  # (C_OUT, 1)

    # ---- BN + ReLU epilogue: one FMA + max, full-width stores -----------------
    # TODO(synk): BatchNorm running_mean/running_var buffer updates (training
    # side effects) are not emitted; the forward uses batch statistics.
    out = jnp.maximum(y * scale + shift, 0.0)             # (C_OUT, N*H*W)

    # Split the two images at the lane-256 vreg boundary (free static slice).
    for n in range(N):
        o_ref[n] = out[:, n * HW:(n + 1) * HW]


@jax.jit
def conv_bn_relu(x_nchw, w_oihw, gamma, beta):
    """PyTorch-convention entry point: x NCHW, weight OIHW. Returns NCHW."""
    # ---- Wrapper-side im2col (layout plumbing; a few KiB, fused by XLA) ------
    x_pad = jnp.pad(x_nchw, ((0, 0), (0, 0), (PAD, PAD), (PAD, PAD)))
    taps = [x_pad[:, :, kh:kh + H, kw:kw + W]             # (N, C_IN, H, W) per tap
            for kh in range(K) for kw in range(K)]
    patches = jnp.stack(taps, axis=0)                     # (K*K, N, C_IN, H, W)
    patches = jnp.transpose(patches, (2, 0, 1, 3, 4))     # (C_IN, K*K, N, H, W)
    patches = patches.reshape(C_IN * KK, NHW)             # (36, 512) lane-dense

    # Weight rows ordered (c_in, kh, kw) to match the patch-row ordering.
    w_mat = w_oihw.reshape(C_OUT, C_IN * KK)              # (8, 36)
    gamma_c = gamma.reshape(C_OUT, 1)
    beta_c = beta.reshape(C_OUT, 1)

    # Whole problem (~80 KiB) lives in VMEM: single invocation, no grid.
    out = pl.pallas_call(
        conv_bn_relu_kernel,
        out_shape=jax.ShapeDtypeStruct((N, C_OUT, HW), jnp.float32),
    )(w_mat, patches, gamma_c, beta_c)

    # (N, C_OUT, H*W) -> (N, C_OUT, H, W): contiguous reshape, no transpose.
    return out.reshape(N, C_OUT, H, W)


if __name__ == "__main__":
    key = jax.random.PRNGKey(0)
    kx, kw = jax.random.split(key)

    # PyTorch-convention shapes: x NCHW, weight OIHW; BN params default init.
    x_nchw = jax.random.normal(kx, (N, C_IN, H, W), jnp.float32)
    w_oihw = jax.random.normal(kw, (C_OUT, C_IN, K, K), jnp.float32) * 0.1
    gamma = jnp.ones((C_OUT,), jnp.float32)
    beta = jnp.zeros((C_OUT,), jnp.float32)

    out = jax.block_until_ready(conv_bn_relu(x_nchw, w_oihw, gamma, beta))

    # Pure-JAX reference: conv -> training-mode BatchNorm (biased var) -> ReLU.
    y = lax.conv_general_dilated(
        x_nchw, w_oihw, (STRIDE, STRIDE), ((PAD, PAD), (PAD, PAD)),
        dimension_numbers=("NCHW", "OIHW", "NCHW"),
        precision=lax.Precision.HIGHEST)
    mean = jnp.mean(y, axis=(0, 2, 3), keepdims=True)
    var = jnp.mean((y - mean) ** 2, axis=(0, 2, 3), keepdims=True)
    g = gamma.reshape(1, C_OUT, 1, 1)
    b = beta.reshape(1, C_OUT, 1, 1)
    ref = jnp.maximum((y - mean) * lax.rsqrt(var + EPS) * g + b, 0.0)

    # Tolerance covers the kernel's default-precision MXU matmul vs the
    # HIGHEST-precision reference and the different summation order
    # (measured error on this setup is ~1e-5).
    err = float(jnp.max(jnp.abs(out - ref)))
    assert jnp.allclose(out, ref, atol=5e-4, rtol=5e-4), f"max abs err {err}"
    print("KERNEL_OK")
</pallas_src>

<mosaic_0001>
module attributes {stable_mosaic.version = 11 : i64} {
  func.func @conv_bn_relu_kernel(%arg0: memref<8x36xf32, #tpu.memory_space<vmem>>, %arg1: memref<36x512xf32, #tpu.memory_space<vmem>>, %arg2: memref<8x1xf32, #tpu.memory_space<vmem>>, %arg3: memref<8x1xf32, #tpu.memory_space<vmem>>, %arg4: memref<2x8x256xf32, #tpu.memory_space<vmem>>) attributes {dimension_semantics = [], scalar_prefetch = 0 : i64, scratch_operands = 0 : i64, tpu.core_type = #tpu.core_type<tc>} {
    %c0 = arith.constant 0 : index
    %c0_0 = arith.constant 0 : index
    %0 = vector.load %arg0[%c0, %c0_0] : memref<8x36xf32, #tpu.memory_space<vmem>>, vector<8x36xf32>
    %c0_1 = arith.constant 0 : index
    %c0_2 = arith.constant 0 : index
    %1 = vector.load %arg1[%c0_1, %c0_2] : memref<36x512xf32, #tpu.memory_space<vmem>>, vector<36x512xf32>
    %cst = arith.constant dense<0.000000e+00> : vector<8x512xf32>
    %2 = tpu.matmul %0, %1, %cst {dimension_numbers = #tpu.dot_dimension_numbers<[1], [0], [0], [1], [0, 0, 1, 1], [], []>} : vector<8x36xf32>, vector<36x512xf32>, vector<8x512xf32> -> vector<8x512xf32>
    %cst_3 = arith.constant dense<0.000000e+00> : vector<8xf32>
    %3 = vector.multi_reduction <add>, %2, %cst_3 [1] : vector<8x512xf32> to vector<8xf32>
    %4 = vector.shape_cast %3 : vector<8xf32> to vector<8x1xf32>
    %cst_4 = arith.constant 5.120000e+02 : f32
    %5 = vector.broadcast %cst_4 : f32 to vector<8x1xf32>
    %6 = arith.divf %4, %5 : vector<8x1xf32>
    %7 = vector.broadcast %6 : vector<8x1xf32> to vector<8x512xf32>
    %8 = arith.subf %2, %7 : vector<8x512xf32>
    %9 = arith.mulf %8, %8 : vector<8x512xf32>
    %cst_5 = arith.constant dense<0.000000e+00> : vector<8xf32>
    %10 = vector.multi_reduction <add>, %9, %cst_5 [1] : vector<8x512xf32> to vector<8xf32>
    %11 = vector.shape_cast %10 : vector<8xf32> to vector<8x1xf32>
    %cst_6 = arith.constant 5.120000e+02 : f32
    %12 = vector.broadcast %cst_6 : f32 to vector<8x1xf32>
    %13 = arith.divf %11, %12 : vector<8x1xf32>
    %cst_7 = arith.constant 9.99999974E-6 : f32
    %14 = vector.broadcast %cst_7 : f32 to vector<8x1xf32>
    %15 = arith.addf %13, %14 : vector<8x1xf32>
    %16 = math.rsqrt %15 : vector<8x1xf32>
    %c0_8 = arith.constant 0 : index
    %c0_9 = arith.constant 0 : index
    %17 = vector.load %arg2[%c0_8, %c0_9] : memref<8x1xf32, #tpu.memory_space<vmem>>, vector<8x1xf32>
    %18 = arith.mulf %17, %16 : vector<8x1xf32>
    %c0_10 = arith.constant 0 : index
    %c0_11 = arith.constant 0 : index
    %19 = vector.load %arg3[%c0_10, %c0_11] : memref<8x1xf32, #tpu.memory_space<vmem>>, vector<8x1xf32>
    %20 = arith.mulf %6, %18 : vector<8x1xf32>
    %21 = arith.subf %19, %20 : vector<8x1xf32>
    %22 = vector.broadcast %18 : vector<8x1xf32> to vector<8x512xf32>
    %23 = arith.mulf %2, %22 : vector<8x512xf32>
    %24 = vector.broadcast %21 : vector<8x1xf32> to vector<8x512xf32>
    %25 = arith.addf %23, %24 : vector<8x512xf32>
    %cst_12 = arith.constant 0.000000e+00 : f32
    %26 = vector.broadcast %cst_12 : f32 to vector<8x512xf32>
    %27 = arith.maximumf %25, %26 : vector<8x512xf32>
    %28 = vector.extract_strided_slice %27 {offsets = [0, 0], sizes = [8, 256], strides = [1, 1]} : vector<8x512xf32> to vector<8x256xf32>
    %c0_13 = arith.constant 0 : index
    %c0_14 = arith.constant 0 : index
    %c0_15 = arith.constant 0 : index
    %29 = vector.load %arg4[%c0_13, %c0_14, %c0_15] : memref<2x8x256xf32, #tpu.memory_space<vmem>>, vector<1x8x256xf32>
    %30 = vector.shape_cast %29 : vector<1x8x256xf32> to vector<8x256xf32>
    %31 = vector.shape_cast %28 : vector<8x256xf32> to vector<1x8x256xf32>
    tpu.vector_store %arg4[%c0_13, %c0_14, %c0_15], %31 {strides = array<i32>} : memref<2x8x256xf32, #tpu.memory_space<vmem>>, vector<1x8x256xf32>,
    %32 = vector.extract_strided_slice %27 {offsets = [0, 256], sizes = [8, 256], strides = [1, 1]} : vector<8x512xf32> to vector<8x256xf32>
    %c1 = arith.constant 1 : index
    %c0_16 = arith.constant 0 : index
    %c0_17 = arith.constant 0 : index
    %33 = vector.load %arg4[%c1, %c0_16, %c0_17] : memref<2x8x256xf32, #tpu.memory_space<vmem>>, vector<1x8x256xf32>
    %34 = vector.shape_cast %33 : vector<1x8x256xf32> to vector<8x256xf32>
    %35 = vector.shape_cast %32 : vector<8x256xf32> to vector<1x8x256xf32>
    tpu.vector_store %arg4[%c1, %c0_16, %c0_17], %35 {strides = array<i32>} : memref<2x8x256xf32, #tpu.memory_space<vmem>>, vector<1x8x256xf32>,
    return
  }
}

</mosaic_0001>

<llo_original>
// kernel: conv_bn_relu.1
$region0: #{conv_bn_relu.1}
  #allocation0 [shape = 'u32[]', space=smem, size = 0x4, offset = 0x4, fixed_abs, tag = 'smem constant byte address 0x4 - core index']
  #allocation1 [shape = 'u32[144,128]{1,0:T(1,128)}', space=vmem, size = 0x12000, scoped, tag = 'internal scratch']
  %s0 = inlined_call_operand.vmem [shape: f32[8,36], index: 0, kind: input, shape index: {}]
  %s1 = inlined_call_operand.vmem [shape: f32[36,512], index: 1, kind: input, shape index: {}]
  %s2 = inlined_call_operand.vmem [shape: f32[8,1], index: 2, kind: input, shape index: {}]
  %s3 = inlined_call_operand.vmem [shape: f32[8,1], index: 3, kind: input, shape index: {}]
  %s4 = inlined_call_operand.vmem [shape: f32[2,8,256], index: 4, kind: output, shape index: {}]
  %s5 = sld [smem:[#allocation0]]
  $region26: #{conv_bn_relu.1} parent=0
    _
  %s7 = ssub.s32 1, %s5
  %s8 = scalar_select 0, %s7, %s5
  // Predicated region
  $region2: #{conv_bn_relu.1} parent=0 // pred_check
    _
  $region3: #{conv_bn_relu.1} parent=0 // pred_check_branch
    %10 = sbr.rel (0) target = $region5
  $region4: #{conv_bn_relu.1} parent=0 // pred_region
    _
  $region5: #{conv_bn_relu.1} parent=0 // pred_fallthru
    _
  // Predicated region
  $region6: #{conv_bn_relu.1} parent=0 // pred_check
    _
  $region7: #{conv_bn_relu.1} parent=0 // pred_check_branch
    %12 = sbr.rel (0) target = $region9
  $region8: #{conv_bn_relu.1} parent=0 // pred_region
    _
  $region9: #{conv_bn_relu.1} parent=0 // pred_fallthru
    _
  // Predicated region
  $region10: #{conv_bn_relu.1} parent=0 // pred_check
    _
  $region11: #{conv_bn_relu.1} parent=0 // pred_check_branch
    %14 = sbr.rel (0) target = $region13
  $region12: #{conv_bn_relu.1} parent=0 // pred_region
    _
  $region13: #{conv_bn_relu.1} parent=0 // pred_fallthru
    _
  // Predicated region
  $region14: #{conv_bn_relu.1} parent=0 // pred_check
    _
  $region15: #{conv_bn_relu.1} parent=0 // pred_check_branch
    %16 = sbr.rel (0) target = $region17
  $region16: #{conv_bn_relu.1} parent=0 // pred_region
    _
  $region17: #{conv_bn_relu.1} parent=0 // pred_fallthru
    _
  %v17 = vld [vmem:[%s0] sm:$0xff]
  %v18 = vld [vmem:[%s1] sm:$0xff]
  %v19 = vld [vmem:[%s1 + $0x8] sm:$0xff]
  %v20 = vld [vmem:[%s1 + $0x10] sm:$0xff]
  %v21 = vld [vmem:[%s1 + $0x18] sm:$0xff]
  %v22 = vld [vmem:[%s1 + $0x20] sm:$0xff]
  %v23 = vld [vmem:[%s1 + $0x28] sm:$0xff]
  %v24 = vld [vmem:[%s1 + $0x30] sm:$0xff]
  %v25 = vld [vmem:[%s1 + $0x38] sm:$0xff]
  %v26 = vld [vmem:[%s1 + $0x40] sm:$0xff]
  %v27 = vld [vmem:[%s1 + $0x48] sm:$0xff]
  %v28 = vld [vmem:[%s1 + $0x50] sm:$0xff]
  %v29 = vld [vmem:[%s1 + $0x58] sm:$0xff]
  %v30 = vld [vmem:[%s1 + $0x60] sm:$0xff]
  %v31 = vld [vmem:[%s1 + $0x68] sm:$0xff]
  %v32 = vld [vmem:[%s1 + $0x70] sm:$0xff]
  %v33 = vld [vmem:[%s1 + $0x78] sm:$0xff]
  %v34 = vld [vmem:[%s1 + $0x80] sm:$0xf]
  %v35 = vld [vmem:[%s1 + $0x88] sm:$0xf]
  %v36 = vld [vmem:[%s1 + $0x90] sm:$0xf]
  %v37 = vld [vmem:[%s1 + $0x98] sm:$0xf]
  %vm38 = vcmask 293888
  %v40 = vsel %vm38, %v17, 0
  %vm42 = vcmask 1043456
  %v44 = vsel %vm42, %v34, 0
  %v47 = vsel %vm42, %v35, 0
  %v50 = vsel %vm42, %v36, 0
  %v53 = vsel %vm42, %v37, 0
  %55 = vmatprep.subr.mxu0 %v19
  %56 = vmatpush1.msra.mxu0 %v18
  %57 = vmatprep.subr.mxu0 %v23
  %58 = vmatpush1.msra.mxu0 %v22
  %59 = vmatprep.subr.mxu0 %v27
  %60 = vmatpush1.msra.mxu0 %v26
  %61 = vmatprep.subr.mxu0 %v31
  %62 = vmatpush1.msra.mxu0 %v30
  %63 = vmatprep.subr.mxu0 %v47
  %64 = vmatpush1.msra.mxu0 %v44
  %65 = vmatprep.subr.mxu0 0.0
  %66 = vmatpush1.msra.mxu0 0.0
  %67 = vmatprep.subr.mxu0 0.0
  %68 = vmatpush1.msra.mxu0 0.0
  %69 = vmatprep.subr.mxu0 0.0
  %70 = vmatpush1.msra.mxu0 0.0
  %71 = vmatprep.subr.mxu0 0.0
  %72 = vmatpush1.msra.mxu0 0.0
  %73 = vmatprep.subr.mxu0 0.0
  %74 = vmatpush1.msra.mxu0 0.0
  %75 = vmatprep.subr.mxu0 0.0
  %76 = vmatpush1.msra.mxu0 0.0
  %77 = vmatprep.subr.mxu0 0.0
  %78 = vmatpush1.msra.mxu0 0.0
  %79 = vmatprep.subr.mxu0 0.0
  %80 = vmatpush1.msra.mxu0 0.0
  %81 = vmatprep.subr.mxu0 0.0
  %82 = vmatpush1.msra.mxu0 0.0
  %83 = vmatprep.subr.mxu0 0.0
  %84 = vmatpush1.msra.mxu0 0.0
  %85 = vmatprep.subr.mxu0 0.0
  %86 = vmatpush1.msra.mxu0 0.0
  %87 = vmatprep.subr.mxu0 0.0
  %88 = vmatpush1.msra.mxu0 0.0
  %89 = vmatprep.subr.mxu0 0.0
  %90 = vmatpush1.msra.mxu0 0.0
  %91 = vmatprep.subr.mxu0 0.0
  %92 = vmatpush1.msra.mxu0 0.0
  %93 = vmatprep.subr.mxu0 0.0
  %94 = vmatpush1.msra.mxu0 0.0
  %95 = vmatprep.subr.mxu0 0.0
  %96 = vmatpush1.msra.mxu0 0.0
  %97 = vmatprep.subr.mxu0 0.0
  %98 = vmatpush1.msra.mxu0 0.0
  %99 = vmatprep.subr.mxu0 0.0
  %100 = vmatpush1.msra.mxu0 0.0
  %101 = vmatprep.subr.mxu0 0.0
  %102 = vmatpush1.msra.mxu0 0.0
  %103 = vmatprep.subr.mxu0 0.0
  %104 = vmatpush1.msra.mxu0 0.0
  %105 = vmatprep.subr.mxu0 0.0
  %106 = vmatpush1.msra.mxu0 0.0
  %107 = vmatprep.subr.mxu0 0.0
  %108 = vmatpush1.msra.mxu0 0.0
  %109 = vmatprep.subr.mxu0 0.0
  %110 = vmatpush1.msra.mxu0 0.0
  %111 = vmatprep.subr.mxu0 0.0
  %112 = vmatpush1.msra.mxu0 0.0
  %113 = vmatprep.subr.mxu0 0.0
  %114 = vmatpush1.msra.mxu0 0.0
  %115 = vmatprep.subr.mxu0 0.0
  %116 = vmatpush1.msra.mxu0 0.0
  %117 = vmatprep.subr.mxu0 0.0
  %118 = vmatpush1.msra.mxu0 0.0
  %119 = vmatprep.mubr.f32.mxu0 0.0
  %120 = vmatmul.mubr.f32.gmra.mrb[0].mxu0 %v40
  %v121 = vpop.f32.mrb[0].mxu0
  %v122 = vadd.f32 0.0, %v121
  %v123 = vpop.f32.mrb[0].mxu0
  %v124 = vadd.f32 0.0, %v123
  %125 = vdwg.mxu0
  %126 = vmatprep.subr.mxu0 %v21
  %127 = vmatpush1.msra.mxu0 %v20
  %128 = vmatprep.subr.mxu0 %v25
  %129 = vmatpush1.msra.mxu0 %v24
  %130 = vmatprep.subr.mxu0 %v29
  %131 = vmatpush1.msra.mxu0 %v28
  %132 = vmatprep.subr.mxu0 %v33
  %133 = vmatpush1.msra.mxu0 %v32
  %134 = vmatprep.subr.mxu0 %v53
  %135 = vmatpush1.msra.mxu0 %v50
  %136 = vmatprep.subr.mxu0 0.0
  %137 = vmatpush1.msra.mxu0 0.0
  %138 = vmatprep.subr.mxu0 0.0
  %139 = vmatpush1.msra.mxu0 0.0
  %140 = vmatprep.subr.mxu0 0.0
  %141 = vmatpush1.msra.mxu0 0.0
  %142 = vmatprep.subr.mxu0 0.0
  %143 = vmatpush1.msra.mxu0 0.0
  %144 = vmatprep.subr.mxu0 0.0
  %145 = vmatpush1.msra.mxu0 0.0
  %146 = vmatprep.subr.mxu0 0.0
  %147 = vmatpush1.msra.mxu0 0.0
  %148 = vmatprep.subr.mxu0 0.0
  %149 = vmatpush1.msra.mxu0 0.0
  %150 = vmatprep.subr.mxu0 0.0
  %151 = vmatpush1.msra.mxu0 0.0
  %152 = vmatprep.subr.mxu0 0.0
  %153 = vmatpush1.msra.mxu0 0.0
  %154 = vmatprep.subr.mxu0 0.0
  %155 = vmatpush1.msra.mxu0 0.0
  %156 = vmatprep.subr.mxu0 0.0
  %157 = vmatpush1.msra.mxu0 0.0
  %158 = vmatprep.subr.mxu0 0.0
  %159 = vmatpush1.msra.mxu0 0.0
  %160 = vmatprep.subr.mxu0 0.0
  %161 = vmatpush1.msra.mxu0 0.0
  %162 = vmatprep.subr.mxu0 0.0
  %163 = vmatpush1.msra.mxu0 0.0
  %164 = vmatprep.subr.mxu0 0.0
  %165 = vmatpush1.msra.mxu0 0.0
  %166 = vmatprep.subr.mxu0 0.0
  %167 = vmatpush1.msra.mxu0 0.0
  %168 = vmatprep.subr.mxu0 0.0
  %169 = vmatpush1.msra.mxu0 0.0
  %170 = vmatprep.subr.mxu0 0.0
  %171 = vmatpush1.msra.mxu0 0.0
  %172 = vmatprep.subr.mxu0 0.0
  %173 = vmatpush1.msra.mxu0 0.0
  %174 = vmatprep.subr.mxu0 0.0
  %175 = vmatpush1.msra.mxu0 0.0
  %176 = vmatprep.subr.mxu0 0.0
  %177 = vmatpush1.msra.mxu0 0.0
  %178 = vmatprep.subr.mxu0 0.0
  %179 = vmatpush1.msra.mxu0 0.0
  %180 = vmatprep.subr.mxu0 0.0
  %181 = vmatpush1.msra.mxu0 0.0
  %182 = vmatprep.subr.mxu0 0.0
  %183 = vmatpush1.msra.mxu0 0.0
  %184 = vmatprep.subr.mxu0 0.0
  %185 = vmatpush1.msra.mxu0 0.0
  %186 = vmatprep.subr.mxu0 0.0
  %187 = vmatpush1.msra.mxu0 0.0
  %188 = vmatprep.subr.mxu0 0.0
  %189 = vmatpush1.msra.mxu0 0.0
  %190 = vmatprep.mubr.f32.mxu0 0.0
  %191 = vmatmul.mubr.f32.gmra.mrb[0].mxu0 %v40
  %v192 = vpop.f32.mrb[0].mxu0
  %v193 = vadd.f32 0.0, %v192
  %v194 = vpop.f32.mrb[0].mxu0
  %v195 = vadd.f32 0.0, %v194
  %196 = vdwg.mxu0
  %v197 = vadd.f32 %v122, %v124
  %v198 = vadd.f32 %v197, %v193
  %v199 = vadd.f32 %v198, %v195
  %200 = vadd.xlane.f32.xlu0 %v199
  %v201 = vpop.xlane.xlu0 %200
  %v202 = vrcp.pop 512.0
  %v203 = vmul.f32 %v201, %v202
  %v204 = vsub.f32 %v122, %v203
  %v205 = vsub.f32 %v124, %v203
  %v206 = vsub.f32 %v193, %v203
  %v207 = vsub.f32 %v195, %v203
  %v208 = vmul.f32 %v204, %v204
  %v209 = vmul.f32 %v205, %v205
  %v210 = vmul.f32 %v206, %v206
  %v211 = vmul.f32 %v207, %v207
  %v212 = vadd.f32 %v208, %v209
  %v213 = vadd.f32 %v212, %v210
  %v214 = vadd.f32 %v213, %v211
  %215 = vadd.xlane.f32.xlu0 %v214
  %v216 = vpop.xlane.xlu0 %215
  %v217 = vmul.f32 %v216, %v202
  %v218 = vadd.f32 %v217, 1e-05
  %v219 = vrsqrt.pop %v218
  %v220 = vld [vmem:[%s2] sm:$0xff]
  %v221 = vmul.f32 %v220, %v219
  %v222 = vld [vmem:[%s3] sm:$0xff]
  %v223 = vmul.f32 %v203, %v221
  %v224 = vsub.f32 %v222, %v223
  %226 = vset.pattern.permute.xlu0 0
  %227 = vperm.xlu0 %226, %v221
  %v228 = vpop.permute.xlu0 %227
  %v230 = vmul.f32 %v122, %v228
  %v231 = vmul.f32 %v124, %v228
  %v232 = vmul.f32 %v193, %v228
  %v233 = vmul.f32 %v195, %v228
  %235 = vset.pattern.permute.xlu0 0
  %236 = vperm.xlu0 %235, %v224
  %v237 = vpop.permute.xlu0 %236
  %v239 = vadd.f32 %v230, %v237
  %v240 = vadd.f32 %v231, %v237
  %v241 = vadd.f32 %v232, %v237
  %v242 = vadd.f32 %v233, %v237
  %v243 = vmax.f32 %v239, 0.0
  %v244 = vmax.f32 %v240, 0.0
  %v245 = vmax.f32 %v241, 0.0
  %v246 = vmax.f32 %v242, 0.0
  %247 = vst [vmem:[%s4] sm:$0xff] %v243
  %248 = vst [vmem:[%s4 + $0x8] sm:$0xff] %v244
  %s249 = scalar_lea.vmem %s4, 16
  %250 = vst [vmem:[%s249] sm:$0xff] %v245
  %251 = vst [vmem:[%s249 + $0x8] sm:$0xff] %v246
  // Predicated region
  $region18: #{conv_bn_relu.1} parent=0 // pred_check
    _
  $region19: #{conv_bn_relu.1} parent=0 // pred_check_branch
    %253 = sbr.rel (0) target = $region21
  $region20: #{conv_bn_relu.1} parent=0 // pred_region
    _
  $region21: #{conv_bn_relu.1} parent=0 // pred_fallthru
    _
  // Predicated region
  $region22: #{conv_bn_relu.1} parent=0 // pred_check
    _
  $region23: #{conv_bn_relu.1} parent=0 // pred_check_branch
    %255 = sbr.rel (0) target = $region25
  $region24: #{conv_bn_relu.1} parent=0 // pred_region
    _
  $region25: #{conv_bn_relu.1} parent=0 // pred_fallthru
    _

</llo_original>
